<compile_context>
chip_gen: v7x
topology: tpu7x:2x2x1
jax: 0.10.0
libtpu: 0.0.40
codegen_flags: <defaults>
</compile_context>

<pallas_src>
import numpy as np

import jax
import jax.numpy as jnp
from jax.experimental import pallas as pl
from jax.experimental.pallas import tpu as pltpu


# ---------------------------------------------------------------------------
# helpers
# ---------------------------------------------------------------------------
def _round_up(x, m):
    return ((x + m - 1) // m) * m


def _pick_tile(n_pad, cap):
    """Largest multiple of 128 that divides n_pad and is <= cap."""
    m = n_pad // 128
    cap_blocks = max(1, cap // 128)
    best = 1
    for d in range(1, min(cap_blocks, m) + 1):
        if m % d == 0:
            best = d
    return best * 128


# ---------------------------------------------------------------------------
# Pallas kernels
# ---------------------------------------------------------------------------
def _xw_kernel(h_ref, w_ref, o_ref):
    """Per-layer feature transform: one row tile of H @ W."""
    o_ref[...] = jnp.dot(
        h_ref[...], w_ref[...], preferred_element_type=jnp.float32
    ).astype(o_ref.dtype)


def _prop_sparse_kernel(rows_ref, cols_ref, first_ref, last_ref,
                        a_ref, xw_ref, b_ref, o_ref, acc_ref):
    """GCN propagation ReLU(A_norm @ XW + b) over a compacted occupied-tile list.

    Grid step t processes A tile (rows[t], cols[t]); first/last flags mark the
    per-row-tile reduction boundaries (accumulator init / epilogue).
    """
    t = pl.program_id(0)

    @pl.when(first_ref[t] == 1)
    def _():
        acc_ref[...] = jnp.zeros_like(acc_ref)

    acc_ref[...] += jnp.dot(
        a_ref[...], xw_ref[...], preferred_element_type=jnp.float32
    )

    @pl.when(last_ref[t] == 1)
    def _():
        o_ref[...] = jnp.maximum(acc_ref[...] + b_ref[...], 0.0).astype(o_ref.dtype)


def _pool_linear_kernel(p_ref, h_ref, wl_ref, bl_ref, o_ref, acc_ref):
    """global_mean_pool (P @ H accumulated over row tiles of H) + final Linear."""
    @pl.when(pl.program_id(0) == 0)
    def _():
        acc_ref[...] = jnp.zeros_like(acc_ref)

    acc_ref[...] += jnp.dot(
        p_ref[...], h_ref[...], preferred_element_type=jnp.float32
    )

    @pl.when(pl.program_id(0) == pl.num_programs(0) - 1)
    def _():
        o_ref[...] = (
            jnp.dot(acc_ref[...], wl_ref[...], preferred_element_type=jnp.float32)
            + bl_ref[...]
        )


# ---------------------------------------------------------------------------
# pallas_call wrappers
# ---------------------------------------------------------------------------
def _xw_matmul(h, w, tm):
    n_pad, cin_pad = h.shape
    cout_pad = w.shape[1]
    return pl.pallas_call(
        _xw_kernel,
        out_shape=jax.ShapeDtypeStruct((n_pad, cout_pad), jnp.bfloat16),
        grid_spec=pltpu.PrefetchScalarGridSpec(
            num_scalar_prefetch=0,
            grid=(n_pad // tm,),
            in_specs=[
                pl.BlockSpec((tm, cin_pad), lambda i: (i, 0)),
                pl.BlockSpec((cin_pad, cout_pad), lambda i: (0, 0)),
            ],
            out_specs=pl.BlockSpec((tm, cout_pad), lambda i: (i, 0)),
        ),
        compiler_params=pltpu.CompilerParams(dimension_semantics=("parallel",)),
    )(h, w)


def _propagate_sparse(a, xw, b, tiles, tm, tk):
    """ReLU(A @ XW + b) over the compacted nonzero-tile list (scalar prefetch)."""
    rows, cols, first, last = tiles
    n_pad = a.shape[0]
    cout_pad = xw.shape[1]
    n_tiles = int(rows.shape[0])
    return pl.pallas_call(
        _prop_sparse_kernel,
        out_shape=jax.ShapeDtypeStruct((n_pad, cout_pad), jnp.bfloat16),
        grid_spec=pltpu.PrefetchScalarGridSpec(
            num_scalar_prefetch=4,
            grid=(n_tiles,),
            in_specs=[
                pl.BlockSpec((tm, tk), lambda t, r, c, f, l: (r[t], c[t])),
                pl.BlockSpec((tk, cout_pad), lambda t, r, c, f, l: (c[t], 0)),
                pl.BlockSpec((1, cout_pad), lambda t, r, c, f, l: (0, 0)),
            ],
            out_specs=pl.BlockSpec((tm, cout_pad), lambda t, r, c, f, l: (r[t], 0)),
            scratch_shapes=[pltpu.VMEM((tm, cout_pad), jnp.float32)],
        ),
        # Rows and the per-row reduction share one compacted grid axis, so it
        # must be sequential.
        compiler_params=pltpu.CompilerParams(dimension_semantics=("arbitrary",)),
    )(rows, cols, first, last, a, xw, b)


def _pool_linear(pool, h, wl, bl, tk):
    g_pad = pool.shape[0]
    n_pad, cpad = h.shape
    return pl.pallas_call(
        _pool_linear_kernel,
        out_shape=jax.ShapeDtypeStruct((g_pad, 128), jnp.float32),
        grid_spec=pltpu.PrefetchScalarGridSpec(
            num_scalar_prefetch=0,
            grid=(n_pad // tk,),
            in_specs=[
                pl.BlockSpec((g_pad, tk), lambda k: (0, k)),
                pl.BlockSpec((tk, cpad), lambda k: (k, 0)),
                pl.BlockSpec((cpad, 128), lambda k: (0, 0)),
                pl.BlockSpec((1, 128), lambda k: (0, 0)),
            ],
            out_specs=pl.BlockSpec((g_pad, 128), lambda k: (0, 0)),
            scratch_shapes=[pltpu.VMEM((g_pad, cpad), jnp.float32)],
        ),
        compiler_params=pltpu.CompilerParams(dimension_semantics=("arbitrary",)),
    )(pool, h, wl, bl)


# ---------------------------------------------------------------------------
# Plain-JAX glue: dense normalized adjacency + mean-pool matrix (padded)
# ---------------------------------------------------------------------------
def _build_graph_operators(edge_index, batch, n, n_pad, g_pad):
    src, dst = edge_index[0], edge_index[1]
    adj = jnp.zeros((n_pad, n_pad), jnp.float32).at[dst, src].set(1.0)
    adj = adj + jnp.eye(n_pad, dtype=jnp.float32)          # self-loops (all rows)
    deg = adj.sum(axis=1)                                   # >= 1 everywhere
    d_inv_sqrt = jax.lax.rsqrt(deg)
    a_norm = (d_inv_sqrt[:, None] * adj * d_inv_sqrt[None, :]).astype(jnp.bfloat16)

    batch_pad = jnp.full((n_pad,), -1, jnp.int32).at[:n].set(batch.astype(jnp.int32))
    one_hot = (
        batch_pad[None, :] == jnp.arange(g_pad, dtype=jnp.int32)[:, None]
    ).astype(jnp.float32)
    counts = one_hot.sum(axis=1, keepdims=True)
    pool = (one_hot / jnp.maximum(counts, 1.0)).astype(jnp.bfloat16)
    return a_norm, pool


def _occupied_tiles(a_norm, tm, tk):
    """Host-side compaction of nonzero (row-tile, k-tile) pairs of A_norm.

    Returns int32 arrays (rows, cols, first, last) for scalar prefetch. Runs
    eagerly (outside jit) since the compacted grid length must be static.
    """
    n_pad = a_norm.shape[0]
    nrt, nkt = n_pad // tm, n_pad // tk
    occ = np.asarray(
        jnp.abs(a_norm.astype(jnp.float32)).reshape(nrt, tm, nkt, tk).sum(axis=(1, 3))
    ) > 0.0
    rows, cols, first, last = [], [], [], []
    for i in range(nrt):
        ks = np.nonzero(occ[i])[0]
        if ks.size == 0:                 # can't happen (self-loops), but be safe
            ks = np.array([min(i, nkt - 1)])
        for j, k in enumerate(ks):
            rows.append(i)
            cols.append(int(k))
            first.append(1 if j == 0 else 0)
            last.append(1 if j == ks.size - 1 else 0)
    as_i32 = lambda v: jnp.asarray(np.array(v, dtype=np.int32))
    return as_i32(rows), as_i32(cols), as_i32(first), as_i32(last)


# ---------------------------------------------------------------------------
# Forward pass
# ---------------------------------------------------------------------------
def my_gcn_forward(x, edge_index, batch, params, num_graphs, *,
                   tm_cap=2048, tk_cap=512):
    # Per the review: on v5e cap tm at 1024 (16 MiB default scoped VMEM); the
    # defaults here stay well under that anyway since tiles are clamped to n_pad.
    n, cin = x.shape
    n_pad = _round_up(n, 128)           # pad to the lane tile only, not to tm/tk
    tm = _pick_tile(n_pad, tm_cap)      # asymmetric: big row tile ...
    tk = _pick_tile(n_pad, tk_cap)      # ... moderate k tile
    g_pad = _round_up(num_graphs, 16)   # bf16 sublane packing

    a_norm, pool = _build_graph_operators(edge_index, batch, n, n_pad, g_pad)
    tiles = _occupied_tiles(a_norm, tm, tk)   # host-side sparsity compaction

    mp_params, (w_lin, b_lin) = params[:-1], params[-1]

    h = None
    for li, (w, b) in enumerate(mp_params):
        ci, co = w.shape
        co_pad = _round_up(co, 128)
        b_pad = jnp.zeros((1, co_pad), jnp.float32).at[:, :co].set(b)

        if li == 0:
            # First layer: cin is tiny (mostly padding) -> plain XLA matmul.
            xw_real = x.astype(jnp.float32) @ w
            xw = (
                jnp.zeros((n_pad, co_pad), jnp.bfloat16)
                .at[:n, :co]
                .set(xw_real.astype(jnp.bfloat16))
            )
        else:
            ci_pad = h.shape[1]
            w_pad = (
                jnp.zeros((ci_pad, co_pad), jnp.bfloat16)
                .at[:ci, :co]
                .set(w.astype(jnp.bfloat16))
            )
            xw = _xw_matmul(h, w_pad, tm)

        h = _propagate_sparse(a_norm, xw, b_pad, tiles, tm, tk)

    # global_mean_pool + Linear(F, 1), lane-padded to 128 output columns.
    c_last = w_lin.shape[0]
    c_last_pad = h.shape[1]
    wl_pad = jnp.zeros((c_last_pad, 128), jnp.float32).at[:c_last, :1].set(w_lin)
    bl_pad = jnp.zeros((1, 128), jnp.float32).at[:, :1].set(b_lin)
    out_padded = _pool_linear(pool, h, wl_pad, bl_pad, tk)
    return out_padded[:num_graphs, :1]


# ---------------------------------------------------------------------------
# Pure-JAX f32 reference (same math as the PyTorch module)
# ---------------------------------------------------------------------------
def my_gcn_reference(x, edge_index, batch, params, num_graphs):
    n = x.shape[0]
    src, dst = edge_index[0], edge_index[1]
    adj = jnp.zeros((n, n), jnp.float32).at[dst, src].set(1.0) + jnp.eye(n)
    deg = adj.sum(axis=1)
    dis = jax.lax.rsqrt(deg)
    a_norm = dis[:, None] * adj * dis[None, :]
    one_hot = (batch[None, :] == jnp.arange(num_graphs)[:, None]).astype(jnp.float32)
    pool = one_hot / jnp.maximum(one_hot.sum(axis=1, keepdims=True), 1.0)
    h = x
    for w, b in params[:-1]:
        h = jnp.maximum(a_norm @ (h @ w) + b, 0.0)
    w_lin, b_lin = params[-1]
    return pool @ h @ w_lin + b_lin


def _ring_edges(offset, n):
    src = jnp.arange(n, dtype=jnp.int32) + offset
    dst = (jnp.arange(n, dtype=jnp.int32) + 1) % n + offset
    # undirected: include both directions
    return jnp.stack(
        [jnp.concatenate([src, dst]), jnp.concatenate([dst, src])], axis=0
    )


if __name__ == "__main__":
    input_channels = 4
    mp_layers = [16, 32]
    nodes_per_graph = 8
    num_graphs = 2
    n = nodes_per_graph * num_graphs

    key = jax.random.PRNGKey(0)
    n_keys = 2 * len(mp_layers) + 3
    keys = jax.random.split(key, n_keys)

    # Deterministic parameter init (shapes follow the module's __init__).
    params = []
    c_in = input_channels
    ki = 0
    for c_out in mp_layers:
        w = jax.random.normal(keys[ki], (c_in, c_out), jnp.float32) / jnp.sqrt(
            jnp.float32(c_in)
        )
        ki += 1
        b = 0.01 * jax.random.normal(keys[ki], (1, c_out), jnp.float32)
        ki += 1
        params.append((w, b))
        c_in = c_out
    w_lin = jax.random.normal(keys[ki], (c_in, 1), jnp.float32) / jnp.sqrt(
        jnp.float32(c_in)
    )
    ki += 1
    b_lin = 0.01 * jax.random.normal(keys[ki], (1, 1), jnp.float32)
    params.append((w_lin, b_lin))

    # Inputs: two ring graphs of 8 nodes each.
    x = jax.random.normal(keys[-1], (n, input_channels), jnp.float32)
    edge_index = jnp.concatenate(
        [_ring_edges(0, nodes_per_graph), _ring_edges(nodes_per_graph, nodes_per_graph)],
        axis=1,
    )
    batch = jnp.concatenate(
        [
            jnp.zeros(nodes_per_graph, jnp.int32),
            jnp.ones(nodes_per_graph, jnp.int32),
        ]
    )

    out = my_gcn_forward(x, edge_index, batch, params, num_graphs)
    out = jax.block_until_ready(out)

    ref = my_gcn_reference(x, edge_index, batch, params, num_graphs)
    assert out.shape == (num_graphs, 1)
    # bf16 streaming of A / features / activations (f32 accumulation) -> loosened
    # tolerance vs the pure-f32 reference.
    assert jnp.allclose(out, ref, atol=5e-2, rtol=5e-2), (out, ref)

    print("KERNEL_OK")
</pallas_src>

<mosaic_0001>
module attributes {stable_mosaic.version = 11 : i64} {
  func.func @_prop_sparse_kernel(%arg0: i32, %arg1: memref<1xi32, #tpu.memory_space<smem>>, %arg2: memref<1xi32, #tpu.memory_space<smem>>, %arg3: memref<1xi32, #tpu.memory_space<smem>>, %arg4: memref<1xi32, #tpu.memory_space<smem>>, %arg5: memref<128x128xbf16, #tpu.memory_space<vmem>>, %arg6: memref<128x128xbf16, #tpu.memory_space<vmem>>, %arg7: memref<1x128xf32, #tpu.memory_space<vmem>>, %arg8: memref<128x128xbf16, #tpu.memory_space<vmem>>, %arg9: memref<128x128xf32, #tpu.memory_space<vmem>>) attributes {dimension_semantics = [#tpu.dimension_semantics<arbitrary>], iteration_bounds = array<i64: 1>, scalar_prefetch = 4 : i64, scratch_operands = 1 : i64, tpu.core_type = #tpu.core_type<tc>, window_params = [{transform_indices = @transform_0, window_bounds = array<i64: 128, 128>}, {transform_indices = @transform_1, window_bounds = array<i64: 128, 128>}, {pipeline_mode = #tpu.pipeline_mode<synchronous>, transform_indices = @transform_2, window_bounds = array<i64: 1, 128>}, {transform_indices = @transform_3, window_bounds = array<i64: 128, 128>}]} {
    %0 = arith.index_cast %arg0 : i32 to index
    %1 = memref.load %arg3[%0] : memref<1xi32, #tpu.memory_space<smem>>
    %c1_i32 = arith.constant 1 : i32
    %2 = arith.cmpi eq, %1, %c1_i32 : i32
    %3 = arith.extui %2 : i1 to i32
    %c0_i32 = arith.constant 0 : i32
    %4 = arith.cmpi ne, %3, %c0_i32 : i32
    scf.if %4 {
      %cst_9 = arith.constant 0.000000e+00 : f32
      %16 = vector.broadcast %cst_9 : f32 to vector<128x128xf32>
      %c0_10 = arith.constant 0 : index
      %c0_11 = arith.constant 0 : index
      %17 = vector.load %arg9[%c0_10, %c0_11] : memref<128x128xf32, #tpu.memory_space<vmem>>, vector<128x128xf32>
      tpu.vector_store %arg9[%c0_10, %c0_11], %16 {strides = array<i32>} : memref<128x128xf32, #tpu.memory_space<vmem>>, vector<128x128xf32>,
    } else {
    }
    %c0 = arith.constant 0 : index
    %c0_0 = arith.constant 0 : index
    %5 = vector.load %arg9[%c0, %c0_0] : memref<128x128xf32, #tpu.memory_space<vmem>>, vector<128x128xf32>
    %c0_1 = arith.constant 0 : index
    %c0_2 = arith.constant 0 : index
    %6 = vector.load %arg5[%c0_1, %c0_2] : memref<128x128xbf16, #tpu.memory_space<vmem>>, vector<128x128xbf16>
    %c0_3 = arith.constant 0 : index
    %c0_4 = arith.constant 0 : index
    %7 = vector.load %arg6[%c0_3, %c0_4] : memref<128x128xbf16, #tpu.memory_space<vmem>>, vector<128x128xbf16>
    %cst = arith.constant dense<0.000000e+00> : vector<128x128xf32>
    %8 = tpu.matmul %6, %7, %cst {dimension_numbers = #tpu.dot_dimension_numbers<[1], [0], [0], [1], [0, 0, 1, 1], [], []>} : vector<128x128xbf16>, vector<128x128xbf16>, vector<128x128xf32> -> vector<128x128xf32>
    %9 = arith.addf %5, %8 : vector<128x128xf32>
    %c0_5 = arith.constant 0 : index
    %c0_6 = arith.constant 0 : index
    %10 = vector.load %arg9[%c0_5, %c0_6] : memref<128x128xf32, #tpu.memory_space<vmem>>, vector<128x128xf32>
    tpu.vector_store %arg9[%c0_5, %c0_6], %9 {strides = array<i32>} : memref<128x128xf32, #tpu.memory_space<vmem>>, vector<128x128xf32>,
    %11 = arith.index_cast %arg0 : i32 to index
    %12 = memref.load %arg4[%11] : memref<1xi32, #tpu.memory_space<smem>>
    %c1_i32_7 = arith.constant 1 : i32
    %13 = arith.cmpi eq, %12, %c1_i32_7 : i32
    %14 = arith.extui %13 : i1 to i32
    %c0_i32_8 = arith.constant 0 : i32
    %15 = arith.cmpi ne, %14, %c0_i32_8 : i32
    scf.if %15 {
      %c0_9 = arith.constant 0 : index
      %c0_10 = arith.constant 0 : index
      %16 = vector.load %arg9[%c0_9, %c0_10] : memref<128x128xf32, #tpu.memory_space<vmem>>, vector<128x128xf32>
      %c0_11 = arith.constant 0 : index
      %c0_12 = arith.constant 0 : index
      %17 = vector.load %arg7[%c0_11, %c0_12] : memref<1x128xf32, #tpu.memory_space<vmem>>, vector<1x128xf32>
      %18 = vector.broadcast %17 : vector<1x128xf32> to vector<128x128xf32>
      %19 = arith.addf %16, %18 : vector<128x128xf32>
      %cst_13 = arith.constant 0.000000e+00 : f32
      %20 = vector.broadcast %cst_13 : f32 to vector<128x128xf32>
      %21 = arith.maximumf %19, %20 : vector<128x128xf32>
      %22 = arith.truncf %21 : vector<128x128xf32> to vector<128x128xbf16>
      %c0_14 = arith.constant 0 : index
      %c0_15 = arith.constant 0 : index
      %23 = vector.load %arg8[%c0_14, %c0_15] : memref<128x128xbf16, #tpu.memory_space<vmem>>, vector<128x128xbf16>
      tpu.vector_store %arg8[%c0_14, %c0_15], %22 {strides = array<i32>} : memref<128x128xbf16, #tpu.memory_space<vmem>>, vector<128x128xbf16>,
    } else {
    }
    return
  }
  func.func @transform_0(%arg0: i32, %arg1: memref<1xi32, #tpu.memory_space<smem>>, %arg2: memref<1xi32, #tpu.memory_space<smem>>, %arg3: memref<1xi32, #tpu.memory_space<smem>>, %arg4: memref<1xi32, #tpu.memory_space<smem>>) -> (i32, i32) {
    %0 = arith.index_cast %arg0 : i32 to index
    %1 = memref.load %arg1[%0] : memref<1xi32, #tpu.memory_space<smem>>
    %2 = arith.index_cast %arg0 : i32 to index
    %3 = memref.load %arg2[%2] : memref<1xi32, #tpu.memory_space<smem>>
    %c0_i32 = arith.constant 0 : i32
    return %1, %3 : i32, i32
  }
  func.func @transform_1(%arg0: i32, %arg1: memref<1xi32, #tpu.memory_space<smem>>, %arg2: memref<1xi32, #tpu.memory_space<smem>>, %arg3: memref<1xi32, #tpu.memory_space<smem>>, %arg4: memref<1xi32, #tpu.memory_space<smem>>) -> (i32, i32) {
    %0 = arith.index_cast %arg0 : i32 to index
    %1 = memref.load %arg2[%0] : memref<1xi32, #tpu.memory_space<smem>>
    %c0_i32 = arith.constant 0 : i32
    %c0_i32_0 = arith.constant 0 : i32
    return %1, %c0_i32 : i32, i32
  }
  func.func @transform_2(%arg0: i32, %arg1: memref<1xi32, #tpu.memory_space<smem>>, %arg2: memref<1xi32, #tpu.memory_space<smem>>, %arg3: memref<1xi32, #tpu.memory_space<smem>>, %arg4: memref<1xi32, #tpu.memory_space<smem>>) -> (i32, i32) {
    %c0_i32 = arith.constant 0 : i32
    %c0_i32_0 = arith.constant 0 : i32
    %c0_i32_1 = arith.constant 0 : i32
    return %c0_i32, %c0_i32_0 : i32, i32
  }
  func.func @transform_3(%arg0: i32, %arg1: memref<1xi32, #tpu.memory_space<smem>>, %arg2: memref<1xi32, #tpu.memory_space<smem>>, %arg3: memref<1xi32, #tpu.memory_space<smem>>, %arg4: memref<1xi32, #tpu.memory_space<smem>>) -> (i32, i32) {
    %0 = arith.index_cast %arg0 : i32 to index
    %1 = memref.load %arg1[%0] : memref<1xi32, #tpu.memory_space<smem>>
    %c0_i32 = arith.constant 0 : i32
    %c0_i32_0 = arith.constant 0 : i32
    return %1, %c0_i32 : i32, i32
  }
}

</mosaic_0001>

<llo_original>
// kernel: tpu_custom_call.1
$region0: #{tpu_custom_call.1}
  #allocation0 [shape = 'u32[]', space=smem, size = 0x4, offset = 0x4, fixed_abs, tag = 'smem constant byte address 0x4 - core index']
  #allocation1 [shape = 'u32[144,128]{1,0:T(1,128)}', space=vmem, size = 0x12000, scoped, tag = 'internal scratch']
  #allocation2 [shape = 'f32[128,128]{1,0:T(8,128)}', space=vmem, size = 0x10000, scoped, tag = 'scratch operand']
  #allocation3 [shape = 's32[1]{0}', space=sflag, size = 0x4, scoped, tag = 'scoped memory for tpu_custom_call.1']
  #allocation4 [shape = 's32[1]{0:T(128)S(6)}', space=smem, size = 0x200, scoped, tag = 'prefetched SMEM operand 0']
  #allocation5 [shape = 's32[1]{0:T(128)S(6)}', space=smem, size = 0x200, scoped, tag = 'prefetched SMEM operand 1']
  #allocation6 [shape = 's32[1]{0:T(128)S(6)}', space=smem, size = 0x200, scoped, tag = 'prefetched SMEM operand 2']
  #allocation7 [shape = 's32[1]{0:T(128)S(6)}', space=smem, size = 0x200, scoped, tag = 'prefetched SMEM operand 3']
  %s0 = inlined_call_operand.<no memory space> [shape: s32[1], index: 0, kind: input, shape index: {}]
  %s1 = inlined_call_operand.<no memory space> [shape: s32[1], index: 1, kind: input, shape index: {}]
  %s2 = inlined_call_operand.<no memory space> [shape: s32[1], index: 2, kind: input, shape index: {}]
  %s3 = inlined_call_operand.<no memory space> [shape: s32[1], index: 3, kind: input, shape index: {}]
  %s4 = inlined_call_operand.hbm [shape: bf16[128,128], index: 4, kind: input, shape index: {}]
  %s5 = inlined_call_operand.hbm [shape: bf16[128,128], index: 5, kind: input, shape index: {}]
  %s6 = inlined_call_operand.vmem [shape: f32[1,128], index: 6, kind: input, shape index: {}]
  %s7 = inlined_call_operand.hbm [shape: bf16[128,128], index: 7, kind: output, shape index: {}]
  %s8 = sld [smem:[#allocation0]]
  $region38: #{tpu_custom_call.1} parent=0
    _
  %s10 = ssub.s32 1, %s8
  %s11 = scalar_select 0, %s10, %s8
  %12 = sst [smem:[#allocation4]] %s0
  %13 = sst [smem:[#allocation5]] %s1
  %14 = sst [smem:[#allocation6]] %s2
  %15 = sst [smem:[#allocation7]] %s3
  $region1: #{tpu_custom_call.1} parent=0
    #allocation8 [shape = 'u8[32768]{0}', space=vmem, size = 0x8000, scoped, tag = 'input window, operand 4, single buffered']
    #allocation9 [shape = 's32[1]{0}', space=sflag, size = 0x4, scoped, tag = 'scoped memory for tpu_custom_call.1']
    #allocation10 [shape = 's32[1]{0}', space=sflag, size = 0x4, scoped, tag = 'scoped memory for tpu_custom_call.1']
    #allocation11 [shape = 'u8[32768]{0}', space=vmem, size = 0x8000, scoped, tag = 'input window, operand 5, single buffered']
    #allocation12 [shape = 's32[1]{0}', space=sflag, size = 0x4, scoped, tag = 'scoped memory for tpu_custom_call.1']
    #allocation13 [shape = 'u8[32768]{0}', space=vmem, size = 0x8000, scoped, tag = 'output window, operand 0, single buffered']
    %16 = vsyncpa [#allocation9], 0
    %17 = vsyncpa [#allocation12], 0
    %18 = vsyncpa [#allocation10], 0
    // Predicated region
    $region2: #{tpu_custom_call.1} parent=1 // pred_check
      _
    $region3: #{tpu_custom_call.1} parent=1 // pred_check_branch
      %20 = sbr.rel (0) target = $region5
    $region4: #{tpu_custom_call.1} parent=1 // pred_region
      %s21 = sld [smem:[#allocation4]]
      %s22 = sld [smem:[#allocation5]]
      %s23 = smul.u32 16, %s21
      %s25 = ssub.s32 1024, 1024
      %26 = vsyncadd [#allocation9], %s25
      %s27 = sadd.s32 %s22, %s23
      %s28 = smul.addr %s27, 64
      %s29 = scalar_lea.hbm %s4, %s28
      %s30 = sshll.u32 [#allocation8], 4
      %s31 = int_to_ptr.vmem [resolvable:$true] %s30
      %36 = dma.hbm_to_vmem [thread:$0]  %s29, 1024, %s31, [#allocation9], 64, 64, 4
    $region5: #{tpu_custom_call.1} parent=1 // pred_fallthru
      _
    // Predicated region
    $region6: #{tpu_custom_call.1} parent=1 // pred_check
      _
    $region7: #{tpu_custom_call.1} parent=1 // pred_check_branch
      %38 = sbr.rel (0) target = $region9
    $region8: #{tpu_custom_call.1} parent=1 // pred_region
      %s39 = sld [smem:[#allocation5]]
      %s40 = smul.u32 16, %s39
      %s42 = ssub.s32 1024, 1024
      %43 = vsyncadd [#allocation12], %s42
      %s44 = smul.addr %s40, 64
      %s45 = scalar_lea.hbm %s5, %s44
      %s46 = sshll.u32 [#allocation11], 4
      %s47 = int_to_ptr.vmem [resolvable:$true] %s46
      %52 = dma.hbm_to_vmem [thread:$0]  %s45, 1024, %s47, [#allocation12], 64, 64, 4
    $region9: #{tpu_custom_call.1} parent=1 // pred_fallthru
      _
    // Predicated region
    $region10: #{tpu_custom_call.1} parent=1 // pred_check
      _
    $region11: #{tpu_custom_call.1} parent=1 // pred_check_branch
      %54 = sbr.rel (0) target = $region13
    $region12: #{tpu_custom_call.1} parent=1 // pred_region
      _
    $region13: #{tpu_custom_call.1} parent=1 // pred_fallthru
      _
    // Predicated region
    $region14: #{tpu_custom_call.1} parent=1 // pred_check
      _
    $region15: #{tpu_custom_call.1} parent=1 // pred_check_branch
      %56 = sbr.rel (0) target = $region17
    $region16: #{tpu_custom_call.1} parent=1 // pred_region
      %57 = dma.done [#allocation9], 1024
    $region17: #{tpu_custom_call.1} parent=1 // pred_fallthru
      _
    // Predicated region
    $region18: #{tpu_custom_call.1} parent=1 // pred_check
      _
    $region19: #{tpu_custom_call.1} parent=1 // pred_check_branch
      %59 = sbr.rel (0) target = $region21
    $region20: #{tpu_custom_call.1} parent=1 // pred_region
      %60 = dma.done [#allocation12], 1024
    $region21: #{tpu_custom_call.1} parent=1 // pred_fallthru
      _
    %s61 = sld [smem:[#allocation4]]
    %s62 = sld [smem:[#allocation5]]
    %s63 = smul.u32 16, %s61
    %s64 = sld [smem:[#allocation5]]
    %s65 = smul.u32 16, %s64
    %s66 = sld [smem:[#allocation4]]
    %s67 = smul.u32 16, %s66
    %s69 = sld [smem:[#allocation6]]
    %p70 = scmp.eq.s32.totalorder %s69, 1
    // Predicated region
    $region22: #{tpu_custom_call.1} parent=1 // pred_check
      %p71 = pneg %p70
    $region23: #{tpu_custom_call.1} parent=1 // pred_check_branch
      %73 = sbr.rel (%p71) target = $region25
    $region24: #{tpu_custom_call.1} parent=1 // pred_region
      %74 = vst [vmem:[#allocation2] sm:$0xff] 0.0
      %75 = vst [vmem:[#allocation2 + $0x8] sm:$0xff] 0.0
      %76 = vst [vmem:[#allocation2 + $0x10] sm:$0xff] 0.0
      %77 = vst [vmem:[#allocation2 + $0x18] sm:$0xff] 0.0
      %78 = vst [vmem:[#allocation2 + $0x20] sm:$0xff] 0.0
      %79 = vst [vmem:[#allocation2 + $0x28] sm:$0xff] 0.0
      %80 = vst [vmem:[#allocation2 + $0x30] sm:$0xff] 0.0
      %81 = vst [vmem:[#allocation2 + $0x38] sm:$0xff] 0.0
      %82 = vst [vmem:[#allocation2 + $0x40] sm:$0xff] 0.0
      %83 = vst [vmem:[#allocation2 + $0x48] sm:$0xff] 0.0
      %84 = vst [vmem:[#allocation2 + $0x50] sm:$0xff] 0.0
      %85 = vst [vmem:[#allocation2 + $0x58] sm:$0xff] 0.0
      %86 = vst [vmem:[#allocation2 + $0x60] sm:$0xff] 0.0
      %87 = vst [vmem:[#allocation2 + $0x68] sm:$0xff] 0.0
      %88 = vst [vmem:[#allocation2 + $0x70] sm:$0xff] 0.0
      %89 = vst [vmem:[#allocation2 + $0x78] sm:$0xff] 0.0
    $region25: #{tpu_custom_call.1} parent=1 // pred_fallthru
      _
    %v90 = vld [vmem:[#allocation2] sm:$0xff]
    %v91 = vld [vmem:[#allocation2 + $0x8] sm:$0xff]
    %v92 = vld [vmem:[#allocation2 + $0x10] sm:$0xff]
    %v93 = vld [vmem:[#allocation2 + $0x18] sm:$0xff]
    %v94 = vld [vmem:[#allocation2 + $0x20] sm:$0xff]
    %v95 = vld [vmem:[#allocation2 + $0x28] sm:$0xff]
    %v96 = vld [vmem:[#allocation2 + $0x30] sm:$0xff]
    %v97 = vld [vmem:[#allocation2 + $0x38] sm:$0xff]
    %v98 = vld [vmem:[#allocation2 + $0x40] sm:$0xff]
    %v99 = vld [vmem:[#allocation2 + $0x48] sm:$0xff]
    %v100 = vld [vmem:[#allocation2 + $0x50] sm:$0xff]
    %v101 = vld [vmem:[#allocation2 + $0x58] sm:$0xff]
    %v102 = vld [vmem:[#allocation2 + $0x60] sm:$0xff]
    %v103 = vld [vmem:[#allocation2 + $0x68] sm:$0xff]
    %v104 = vld [vmem:[#allocation2 + $0x70] sm:$0xff]
    %v105 = vld [vmem:[#allocation2 + $0x78] sm:$0xff]
    %v106 = vld [vmem:[#allocation8] sm:$0xf]
    %v107 = vld [vmem:[#allocation8 + $0x4] sm:$0xf]
    %v108 = vld [vmem:[#allocation8 + $0x8] sm:$0xf]
    %v109 = vld [vmem:[#allocation8 + $0xc] sm:$0xf]
    %v110 = vld [vmem:[#allocation8 + $0x10] sm:$0xf]
    %v111 = vld [vmem:[#allocation8 + $0x14] sm:$0xf]
    %v112 = vld [vmem:[#allocation8 + $0x18] sm:$0xf]
    %v113 = vld [vmem:[#allocation8 + $0x1c] sm:$0xf]
    %v114 = vld [vmem:[#allocation8 + $0x20] sm:$0xf]
    %v115 = vld [vmem:[#allocation8 + $0x24] sm:$0xf]
    %v116 = vld [vmem:[#allocation8 + $0x28] sm:$0xf]
    %v117 = vld [vmem:[#allocation8 + $0x2c] sm:$0xf]
    %v118 = vld [vmem:[#allocation8 + $0x30] sm:$0xf]
    %v119 = vld [vmem:[#allocation8 + $0x34] sm:$0xf]
    %v120 = vld [vmem:[#allocation8 + $0x38] sm:$0xf]
    %v121 = vld [vmem:[#allocation8 + $0x3c] sm:$0xf]
    %v122 = vld [vmem:[#allocation11] sm:$0xf]
    %v123 = vld [vmem:[#allocation11 + $0x4] sm:$0xf]
    %v124 = vld [vmem:[#allocation11 + $0x8] sm:$0xf]
    %v125 = vld [vmem:[#allocation11 + $0xc] sm:$0xf]
    %v126 = vld [vmem:[#allocation11 + $0x10] sm:$0xf]
    %v127 = vld [vmem:[#allocation11 + $0x14] sm:$0xf]
    %v128 = vld [vmem:[#allocation11 + $0x18] sm:$0xf]
    %v129 = vld [vmem:[#allocation11 + $0x1c] sm:$0xf]
    %v130 = vld [vmem:[#allocation11 + $0x20] sm:$0xf]
    %v131 = vld [vmem:[#allocation11 + $0x24] sm:$0xf]
    %v132 = vld [vmem:[#allocation11 + $0x28] sm:$0xf]
    %v133 = vld [vmem:[#allocation11 + $0x2c] sm:$0xf]
    %v134 = vld [vmem:[#allocation11 + $0x30] sm:$0xf]
    %v135 = vld [vmem:[#allocation11 + $0x34] sm:$0xf]
    %v136 = vld [vmem:[#allocation11 + $0x38] sm:$0xf]
    %v137 = vld [vmem:[#allocation11 + $0x3c] sm:$0xf]
    %v154 = vunpack.c.l.b16 %v106
    %v155 = vunpack.c.l.b16 %v107
    %v156 = vunpack.c.l.b16 %v108
    %v157 = vunpack.c.l.b16 %v109
    %v158 = vunpack.c.l.b16 %v110
    %v159 = vunpack.c.l.b16 %v111
    %v160 = vunpack.c.l.b16 %v112
    %v161 = vunpack.c.l.b16 %v113
    %v162 = vunpack.c.l.b16 %v114
    %v163 = vunpack.c.l.b16 %v115
    %v164 = vunpack.c.l.b16 %v116
    %v165 = vunpack.c.l.b16 %v117
    %v166 = vunpack.c.l.b16 %v118
    %v167 = vunpack.c.l.b16 %v119
    %v168 = vunpack.c.l.b16 %v120
    %v169 = vunpack.c.l.b16 %v121
    %v170 = vpack.c.b16 %v155, %v154
    %v171 = vpack.c.b16 %v157, %v156
    %v172 = vpack.c.b16 %v159, %v158
    %v173 = vpack.c.b16 %v161, %v160
    %v174 = vpack.c.b16 %v163, %v162
    %v175 = vpack.c.b16 %v165, %v164
    %v176 = vpack.c.b16 %v167, %v166
    %v177 = vpack.c.b16 %v169, %v168
    %v202 = vunpack.c.l.b16 %v122
    %v203 = vunpack.c.l.b16 %v123
    %v204 = vunpack.c.l.b16 %v124
    %v205 = vunpack.c.l.b16 %v125
    %v206 = vunpack.c.l.b16 %v126
    %v207 = vunpack.c.l.b16 %v127
    %v208 = vunpack.c.l.b16 %v128
    %v209 = vunpack.c.l.b16 %v129
    %v210 = vunpack.c.l.b16 %v130
    %v211 = vunpack.c.l.b16 %v131
    %v212 = vunpack.c.l.b16 %v132
    %v213 = vunpack.c.l.b16 %v133
    %v214 = vunpack.c.l.b16 %v134
    %v215 = vunpack.c.l.b16 %v135
    %v216 = vunpack.c.l.b16 %v136
    %v217 = vunpack.c.l.b16 %v137
    %v218 = vpack.c.b16 %v203, %v202
    %v219 = vpack.c.b16 %v205, %v204
    %v220 = vpack.c.b16 %v207, %v206
    %v221 = vpack.c.b16 %v209, %v208
    %v222 = vpack.c.b16 %v211, %v210
    %v223 = vpack.c.b16 %v213, %v212
    %v224 = vpack.c.b16 %v215, %v214
    %v225 = vpack.c.b16 %v217, %v216
    %234 = vmatprep.subr.bf16.mxu0 0
    %235 = vmatpush1.bf16.msra.mxu0 %v218
    %236 = vmatprep.subr.bf16.mxu0 0
    %237 = vmatpush1.bf16.msra.mxu0 %v219
    %238 = vmatprep.subr.bf16.mxu0 0
    %239 = vmatpush1.bf16.msra.mxu0 %v220
    %240 = vmatprep.subr.bf16.mxu0 0
    %241 = vmatpush1.bf16.msra.mxu0 %v221
    %242 = vmatprep.subr.bf16.mxu0 0
    %243 = vmatpush1.bf16.msra.mxu0 %v222
    %244 = vmatprep.subr.bf16.mxu0 0
    %245 = vmatpush1.bf16.msra.mxu0 %v223
    %246 = vmatprep.subr.bf16.mxu0 0
    %247 = vmatpush1.bf16.msra.mxu0 %v224
    %248 = vmatprep.subr.bf16.mxu0 0
    %249 = vmatpush1.bf16.msra.mxu0 %v225
    %250 = vmatprep.subr.bf16.mxu0 0
    %251 = vmatpush1.bf16.msra.mxu0 0
    %252 = vmatprep.subr.bf16.mxu0 0
    %253 = vmatpush1.bf16.msra.mxu0 0
    %254 = vmatprep.subr.bf16.mxu0 0
    %255 = vmatpush1.bf16.msra.mxu0 0
    %256 = vmatprep.subr.bf16.mxu0 0
    %257 = vmatpush1.bf16.msra.mxu0 0
    %258 = vmatprep.subr.bf16.mxu0 0
    %259 = vmatpush1.bf16.msra.mxu0 0
    %260 = vmatprep.subr.bf16.mxu0 0
    %261 = vmatpush1.bf16.msra.mxu0 0
    %262 = vmatprep.subr.bf16.mxu0 0
    %263 = vmatpush1.bf16.msra.mxu0 0
    %264 = vmatprep.subr.bf16.mxu0 0
    %265 = vmatpush1.bf16.msra.mxu0 0
    %266 = vmatprep.mubr.bf16.mxu0 0
    %267 = vmatmul.mubr.bf16.gmra.mrb[0].mxu0 %v170
    %v268 = vpop.f32.mrb[0].mxu0
    %v269 = vadd.f32 0.0, %v268
    %v270 = vpop.f32.mrb[0].mxu0
    %v271 = vpop.f32.mrb[0].mxu0
    %v272 = vadd.f32 0.0, %v271
    %v273 = vpop.f32.mrb[0].mxu0
    %274 = vmatprep.mubr.bf16.mxu0 0
    %275 = vmatmul.mubr.bf16.gmra.mrb[0].mxu0 %v171
    %v276 = vpop.f32.mrb[0].mxu0
    %v277 = vadd.f32 0.0, %v276
    %v278 = vpop.f32.mrb[0].mxu0
    %v279 = vpop.f32.mrb[0].mxu0
    %v280 = vadd.f32 0.0, %v279
    %v281 = vpop.f32.mrb[0].mxu0
    %282 = vmatprep.mubr.bf16.mxu0 0
    %283 = vmatmul.mubr.bf16.gmra.mrb[0].mxu0 %v172
    %v284 = vpop.f32.mrb[0].mxu0
    %v285 = vadd.f32 0.0, %v284
    %v286 = vpop.f32.mrb[0].mxu0
    %v287 = vpop.f32.mrb[0].mxu0
    %v288 = vadd.f32 0.0, %v287
    %v289 = vpop.f32.mrb[0].mxu0
    %290 = vmatprep.mubr.bf16.mxu0 0
    %291 = vmatmul.mubr.bf16.gmra.mrb[0].mxu0 %v173
    %v292 = vpop.f32.mrb[0].mxu0
    %v293 = vadd.f32 0.0, %v292
    %v294 = vpop.f32.mrb[0].mxu0
    %v295 = vpop.f32.mrb[0].mxu0
    %v296 = vadd.f32 0.0, %v295
    %v297 = vpop.f32.mrb[0].mxu0
    %298 = vmatprep.mubr.bf16.mxu0 0
    %299 = vmatmul.mubr.bf16.gmra.mrb[0].mxu0 %v174
    %v300 = vpop.f32.mrb[0].mxu0
    %v301 = vadd.f32 0.0, %v300
    %v302 = vpop.f32.mrb[0].mxu0
    %v303 = vpop.f32.mrb[0].mxu0
    %v304 = vadd.f32 0.0, %v303
    %v305 = vpop.f32.mrb[0].mxu0
    %306 = vmatprep.mubr.bf16.mxu0 0
    %307 = vmatmul.mubr.bf16.gmra.mrb[0].mxu0 %v175
    %v308 = vpop.f32.mrb[0].mxu0
    %v309 = vadd.f32 0.0, %v308
    %v310 = vpop.f32.mrb[0].mxu0
    %v311 = vpop.f32.mrb[0].mxu0
    %v312 = vadd.f32 0.0, %v311
    %v313 = vpop.f32.mrb[0].mxu0
    %314 = vmatprep.mubr.bf16.mxu0 0
    %315 = vmatmul.mubr.bf16.gmra.mrb[0].mxu0 %v176
    %v316 = vpop.f32.mrb[0].mxu0
    %v317 = vadd.f32 0.0, %v316
    %v318 = vpop.f32.mrb[0].mxu0
    %v319 = vpop.f32.mrb[0].mxu0
    %v320 = vadd.f32 0.0, %v319
    %v321 = vpop.f32.mrb[0].mxu0
    %322 = vmatprep.mubr.bf16.mxu0 0
    %323 = vmatmul.mubr.bf16.gmra.mrb[0].mxu0 %v177
    %v324 = vpop.f32.mrb[0].mxu0
    %v325 = vadd.f32 0.0, %v324
    %v326 = vpop.f32.mrb[0].mxu0
    %v327 = vpop.f32.mrb[0].mxu0
    %v328 = vadd.f32 0.0, %v327
    %v329 = vpop.f32.mrb[0].mxu0
    %330 = vdwg.mxu0
    %v331 = vadd.f32 %v90, %v269
    %v332 = vadd.f32 %v91, %v272
    %v333 = vadd.f32 %v92, %v277
    %v334 = vadd.f32 %v93, %v280
    %v335 = vadd.f32 %v94, %v285
    %v336 = vadd.f32 %v95, %v288
    %v337 = vadd.f32 %v96, %v293
    %v338 = vadd.f32 %v97, %v296
    %v339 = vadd.f32 %v98, %v301
    %v340 = vadd.f32 %v99, %v304
    %v341 = vadd.f32 %v100, %v309
    %v342 = vadd.f32 %v101, %v312
    %v343 = vadd.f32 %v102, %v317
    %v344 = vadd.f32 %v103, %v320
    %v345 = vadd.f32 %v104, %v325
    %v346 = vadd.f32 %v105, %v328
    %347 = vst [vmem:[#allocation2] sm:$0xff] %v331
    %348 = vst [vmem:[#allocation2 + $0x8] sm:$0xff] %v332
    %349 = vst [vmem:[#allocation2 + $0x10] sm:$0xff] %v333
    %350 = vst [vmem:[#allocation2 + $0x18] sm:$0xff] %v334
    %351 = vst [vmem:[#allocation2 + $0x20] sm:$0xff] %v335
    %352 = vst [vmem:[#allocation2 + $0x28] sm:$0xff] %v336
    %353 = vst [vmem:[#allocation2 + $0x30] sm:$0xff] %v337
    %354 = vst [vmem:[#allocation2 + $0x38] sm:$0xff] %v338
    %355 = vst [vmem:[#allocation2 + $0x40] sm:$0xff] %v339
    %356 = vst [vmem:[#allocation2 + $0x48] sm:$0xff] %v340
    %357 = vst [vmem:[#allocation2 + $0x50] sm:$0xff] %v341
    %358 = vst [vmem:[#allocation2 + $0x58] sm:$0xff] %v342
    %359 = vst [vmem:[#allocation2 + $0x60] sm:$0xff] %v343
    %360 = vst [vmem:[#allocation2 + $0x68] sm:$0xff] %v344
    %361 = vst [vmem:[#allocation2 + $0x70] sm:$0xff] %v345
    %362 = vst [vmem:[#allocation2 + $0x78] sm:$0xff] %v346
    %s363 = sld [smem:[#allocation7]]
    %p364 = scmp.eq.s32.totalorder %s363, 1
    // Predicated region
    $region26: #{tpu_custom_call.1} parent=1 // pred_check
      %p365 = pneg %p364
    $region27: #{tpu_custom_call.1} parent=1 // pred_check_branch
      %367 = sbr.rel (%p365) target = $region29
    $region28: #{tpu_custom_call.1} parent=1 // pred_region
      %v368 = vld [vmem:[#allocation2] sm:$0xff]
      %v369 = vld [vmem:[#allocation2 + $0x8] sm:$0xff]
      %v370 = vld [vmem:[#allocation2 + $0x10] sm:$0xff]
      %v371 = vld [vmem:[#allocation2 + $0x18] sm:$0xff]
      %v372 = vld [vmem:[#allocation2 + $0x20] sm:$0xff]
      %v373 = vld [vmem:[#allocation2 + $0x28] sm:$0xff]
      %v374 = vld [vmem:[#allocation2 + $0x30] sm:$0xff]
      %v375 = vld [vmem:[#allocation2 + $0x38] sm:$0xff]
      %v376 = vld [vmem:[#allocation2 + $0x40] sm:$0xff]
      %v377 = vld [vmem:[#allocation2 + $0x48] sm:$0xff]
      %v378 = vld [vmem:[#allocation2 + $0x50] sm:$0xff]
      %v379 = vld [vmem:[#allocation2 + $0x58] sm:$0xff]
      %v380 = vld [vmem:[#allocation2 + $0x60] sm:$0xff]
      %v381 = vld [vmem:[#allocation2 + $0x68] sm:$0xff]
      %v382 = vld [vmem:[#allocation2 + $0x70] sm:$0xff]
      %v383 = vld [vmem:[#allocation2 + $0x78] sm:$0xff]
      %v384 = vld [vmem:[%s6] sm:$0x1]
      %v386 = vlaneseq
      %v387 = vshrl.u32 %v386, 7
      %v388 = vsub.s32 0, %v387
      %v389 = vrot.slane %v384, %v388
      %v391 = vadd.f32 %v368, %v389
      %v392 = vadd.f32 %v369, %v389
      %v393 = vadd.f32 %v370, %v389
      %v394 = vadd.f32 %v371, %v389
      %v395 = vadd.f32 %v372, %v389
      %v396 = vadd.f32 %v373, %v389
      %v397 = vadd.f32 %v374, %v389
      %v398 = vadd.f32 %v375, %v389
      %v399 = vadd.f32 %v376, %v389
      %v400 = vadd.f32 %v377, %v389
      %v401 = vadd.f32 %v378, %v389
      %v402 = vadd.f32 %v379, %v389
      %v403 = vadd.f32 %v380, %v389
      %v404 = vadd.f32 %v381, %v389
      %v405 = vadd.f32 %v382, %v389
      %v406 = vadd.f32 %v383, %v389
      %v407 = vmax.f32 %v391, 0.0
      %v408 = vmax.f32 %v392, 0.0
      %v409 = vmax.f32 %v393, 0.0
      %v410 = vmax.f32 %v394, 0.0
      %v411 = vmax.f32 %v395, 0.0
      %v412 = vmax.f32 %v396, 0.0
      %v413 = vmax.f32 %v397, 0.0
      %v414 = vmax.f32 %v398, 0.0
      %v415 = vmax.f32 %v399, 0.0
      %v416 = vmax.f32 %v400, 0.0
      %v417 = vmax.f32 %v401, 0.0
      %v418 = vmax.f32 %v402, 0.0
      %v419 = vmax.f32 %v403, 0.0
      %v420 = vmax.f32 %v404, 0.0
      %v421 = vmax.f32 %v405, 0.0
      %v422 = vmax.f32 %v406, 0.0
      %v423 = vpack.c.bf16 %v408, %v407
      %v424 = vpack.c.bf16 %v410, %v409
      %v425 = vpack.c.bf16 %v412, %v411
      %v426 = vpack.c.bf16 %v414, %v413
      %v427 = vpack.c.bf16 %v416, %v415
      %v428 = vpack.c.bf16 %v418, %v417
      %v429 = vpack.c.bf16 %v420, %v419
      %v430 = vpack.c.bf16 %v422, %v421
      %v439 = vunpack.c.l.b16 %v423
      %v440 = vunpack.c.h.b16 %v423
      %v441 = vunpack.c.l.b16 %v424
      %v442 = vunpack.c.h.b16 %v424
      %v443 = vunpack.c.l.b16 %v425
      %v444 = vunpack.c.h.b16 %v425
      %v445 = vunpack.c.l.b16 %v426
      %v446 = vunpack.c.h.b16 %v426
      %v447 = vunpack.c.l.b16 %v427
      %v448 = vunpack.c.h.b16 %v427
      %v449 = vunpack.c.l.b16 %v428
      %v450 = vunpack.c.h.b16 %v428
      %v451 = vunpack.c.l.b16 %v429
      %v452 = vunpack.c.h.b16 %v429
      %v453 = vunpack.c.l.b16 %v430
      %v454 = vunpack.c.h.b16 %v430
      %v455 = vpack.c.b16 %v439, %v439
      %v456 = vpack.c.b16 %v440, %v440
      %v457 = vpack.c.b16 %v441, %v441
      %v458 = vpack.c.b16 %v442, %v442
      %v459 = vpack.c.b16 %v443, %v443
      %v460 = vpack.c.b16 %v444, %v444
      %v461 = vpack.c.b16 %v445, %v445
      %v462 = vpack.c.b16 %v446, %v446
      %v463 = vpack.c.b16 %v447, %v447
      %v464 = vpack.c.b16 %v448, %v448
      %v465 = vpack.c.b16 %v449, %v449
      %v466 = vpack.c.b16 %v450, %v450
      %v467 = vpack.c.b16 %v451, %v451
      %v468 = vpack.c.b16 %v452, %v452
      %v469 = vpack.c.b16 %v453, %v453
      %v470 = vpack.c.b16 %v454, %v454
      %487 = vst [vmem:[#allocation13] sm:$0xf] %v455
      %488 = vst [vmem:[#allocation13 + $0x4] sm:$0xf] %v456
      %489 = vst [vmem:[#allocation13 + $0x8] sm:$0xf] %v457
      %490 = vst [vmem:[#allocation13 + $0xc] sm:$0xf] %v458
      %491 = vst [vmem:[#allocation13 + $0x10] sm:$0xf] %v459
      %492 = vst [vmem:[#allocation13 + $0x14] sm:$0xf] %v460
      %493 = vst [vmem:[#allocation13 + $0x18] sm:$0xf] %v461
      %494 = vst [vmem:[#allocation13 + $0x1c] sm:$0xf] %v462
      %495 = vst [vmem:[#allocation13 + $0x20] sm:$0xf] %v463
      %496 = vst [vmem:[#allocation13 + $0x24] sm:$0xf] %v464
      %497 = vst [vmem:[#allocation13 + $0x28] sm:$0xf] %v465
      %498 = vst [vmem:[#allocation13 + $0x2c] sm:$0xf] %v466
      %499 = vst [vmem:[#allocation13 + $0x30] sm:$0xf] %v467
      %500 = vst [vmem:[#allocation13 + $0x34] sm:$0xf] %v468
      %501 = vst [vmem:[#allocation13 + $0x38] sm:$0xf] %v469
      %502 = vst [vmem:[#allocation13 + $0x3c] sm:$0xf] %v470
    $region29: #{tpu_custom_call.1} parent=1 // pred_fallthru
      _
    // Predicated region
    $region30: #{tpu_custom_call.1} parent=1 // pred_check
      _
    $region31: #{tpu_custom_call.1} parent=1 // pred_check_branch
      %504 = sbr.rel (0) target = $region33
    $region32: #{tpu_custom_call.1} parent=1 // pred_region
      %s505 = sld [smem:[#allocation4]]
      %s506 = smul.u32 16, %s505
      %s508 = ssub.s32 1024, 1024
      %509 = vsyncadd [#allocation10], %s508
      %s510 = smul.addr %s506, 64
      %s511 = scalar_lea.hbm %s7, %s510
      %s512 = sshll.u32 [#allocation13], 4
      %s513 = int_to_ptr.vmem [resolvable:$true] %s512
      %518 = dma.vmem_to_hbm [thread:$0]  %s513, 1024, %s511, [#allocation10], 64, 64, 4
    $region33: #{tpu_custom_call.1} parent=1 // pred_fallthru
      _
    // Predicated region
    $region34: #{tpu_custom_call.1} parent=1 // pred_check
      _
    $region35: #{tpu_custom_call.1} parent=1 // pred_check_branch
      %520 = sbr.rel (0) target = $region37
    $region36: #{tpu_custom_call.1} parent=1 // pred_region
      %521 = dma.done [#allocation10], 1024
    $region37: #{tpu_custom_call.1} parent=1 // pred_fallthru
      _
    %522 = vsyncpa [#allocation9], 1
    %523 = vsyncpa [#allocation12], 1
    %524 = vsyncpa [#allocation10], 1

</llo_original>
